<compile_context>
chip_gen: v7x
topology: tpu7x:2x2x1
jax: 0.10.0
libtpu: 0.0.40
codegen_flags: <defaults>
</compile_context>

<pallas_src>
import functools

import jax
import jax.numpy as jnp
from jax.experimental import pallas as pl
from jax.experimental.pallas import tpu as pltpu


def _infonce_kernel(feat_ref, lab_c_ref, lab_row_ref, loss_ref, valid_ref,
                    *, inv_temperature, chunk_size):
    i = pl.program_id(0)
    C = chunk_size
    B = feat_ref.shape[0]
    chunk_start = pl.multiple_of(i * C, C)

    # Query rows sliced from the resident (single-buffered) feature buffer.
    cf = feat_ref[pl.ds(chunk_start, C), :]                     # (C, D)
    ff = feat_ref[...]                                          # (B, D)

    # (C, D) x (B, D)^T -> (C, B); bf16 (default) operands, f32 accumulate.
    sim = jax.lax.dot_general(
        cf, ff, (((1,), (1,)), ((), ())),
        preferred_element_type=jnp.float32)                     # == cos / tau

    # Self-mask: column (chunk_start + r) excluded for query row r.
    row = jax.lax.broadcasted_iota(jnp.int32, (C, B), 0)
    col = jax.lax.broadcasted_iota(jnp.int32, (C, B), 1)
    mask_self = col != (row + chunk_start)
    mask_self_f = mask_self.astype(jnp.float32)

    # Label-positive mask (self excluded). Chunk labels arrive as a (C, 1)
    # block; all labels as a resident (1, B) row.
    mask_lab = (lab_c_ref[...] == lab_row_ref[...]) & mask_self
    mask_lab_f = mask_lab.astype(jnp.float32)

    # Stabilized softmax denominator. sqrt(1/tau) is folded into the features,
    # so sim <= 1/tau: use the analytic bound instead of a per-row max
    # reduction (the self column makes the true row max ~= 1/tau anyway).
    sim = sim - inv_temperature
    exp_sim = jnp.maximum(jnp.exp(sim), 1e-8) * mask_self_f
    lse = jnp.log(jnp.sum(exp_sim, axis=1, keepdims=True) + 1e-8)   # (C, 1)

    # Fused loss algebra: -sum(mask * (sim - lse)) = cnt * lse - sum(mask*sim).
    cnt_lab = jnp.sum(mask_lab_f, axis=1, keepdims=True)            # (C, 1)
    sum_lab = jnp.sum(mask_lab_f * sim, axis=1, keepdims=True)      # (C, 1)
    sum_self = jnp.sum(mask_self_f * sim, axis=1, keepdims=True)    # (C, 1)

    # Chunk-level fallback to the self-mask when no label positives exist
    # anywhere in the chunk (matches the PyTorch forward). The select runs on
    # (C, 1) reductions -- no (C, B) where-select is materialized.
    any_pos = jnp.sum(cnt_lab) > 0.0
    pos_cnt = jnp.where(any_pos, cnt_lab, jnp.float32(B - 1))
    pos_sum = jnp.where(any_pos, sum_lab, sum_self)

    valid = (pos_cnt > 0.0).astype(jnp.float32)
    row_loss = pos_cnt * lse - pos_sum
    row_loss = valid * row_loss / jnp.maximum(pos_cnt, 1.0)

    loss_ref[...] = row_loss
    valid_ref[...] = valid


def _default_vmem_limit():
    """~75% of physical VMEM: ~48 MiB on v7x (64 MiB/TC), ~96 MiB on v5e/v6e."""
    cap = 128 * 1024 * 1024
    try:
        info_fn = getattr(pltpu, "get_tpu_info", None)
        if info_fn is not None:
            cap = int(getattr(info_fn(), "vmem_capacity_bytes", cap))
    except Exception:
        pass
    return min((cap * 3) // 4, 100 * 1024 * 1024)


def _build_infonce_call(B, D, num_chunks, chunk_size, feature_dtype,
                        inv_temperature, single_buffer):
    kernel = functools.partial(_infonce_kernel,
                               inv_temperature=inv_temperature,
                               chunk_size=chunk_size)

    def resident(shape):
        # Grid-invariant input: fetched once; single-buffer when supported.
        imap = lambda i: (0,) * len(shape)
        if single_buffer:
            return pl.BlockSpec(shape, imap, pipeline_mode=pl.Buffered(1))
        return pl.BlockSpec(shape, imap)

    return pl.pallas_call(
        kernel,
        grid=(num_chunks,),
        in_specs=[
            resident((B, D)),                                  # normalized feats (resident)
            pl.BlockSpec((chunk_size, 1), lambda i: (i, 0)),   # this chunk's labels (column)
            resident((1, B)),                                  # all labels (row)
        ],
        out_specs=[
            pl.BlockSpec((chunk_size, 1), lambda i: (i, 0)),
            pl.BlockSpec((chunk_size, 1), lambda i: (i, 0)),
        ],
        out_shape=[
            jax.ShapeDtypeStruct((B, 1), jnp.float32),
            jax.ShapeDtypeStruct((B, 1), jnp.float32),
        ],
        compiler_params=pltpu.CompilerParams(
            dimension_semantics=("parallel",),
            vmem_limit_bytes=_default_vmem_limit()),
    )


def infonce_loss(features, labels=None, *, temperature=0.07, reduction='mean',
                 chunk_size=256, feature_dtype=jnp.bfloat16):
    """Pallas InfoNCE forward. features: [B, D] float, labels: [B] int or None."""
    B, D = features.shape
    temp = max(float(temperature), 1e-4)
    inv_temperature = 1.0 / temp

    # Keep >= 2 grid steps where possible so the "parallel" axis can shard
    # across both TensorCores on v7x.
    chunk_size = min(int(chunk_size), B)
    if chunk_size == B and B % 16 == 0:
        chunk_size = B // 2
    assert B % chunk_size == 0, "requires B divisible by chunk_size"
    assert chunk_size % 8 == 0, "chunk_size must be a multiple of 8 (f32 sublane)"
    num_chunks = B // chunk_size

    # Normalize once in f32 (F.normalize(dim=1): x / max(||x||_2, 1e-12)),
    # fold sqrt(1/tau) into the single feature buffer, then cast to the MXU
    # feed dtype (bf16 by default; f32 accumulation happens in the kernel).
    feats = features.astype(jnp.float32)
    feats = feats / jnp.maximum(
        jnp.sqrt(jnp.sum(feats * feats, axis=1, keepdims=True)), 1e-12)
    feats = (feats * jnp.sqrt(inv_temperature)).astype(feature_dtype)

    if labels is None:
        # PyTorch uses the self-mask when labels are absent; all-distinct
        # labels make the label mask empty and trigger the same fallback.
        labels = jnp.arange(B, dtype=jnp.int32)
    lab_col = labels.reshape(B, 1).astype(jnp.int32)
    lab_row = labels.reshape(1, B).astype(jnp.int32)

    try:
        call = _build_infonce_call(B, D, num_chunks, chunk_size, feature_dtype,
                                   inv_temperature, single_buffer=True)
        row_loss, row_valid = call(feats, lab_col, lab_row)
    except Exception:
        # pipeline_mode=pl.Buffered(1) not supported on this jax build:
        # fall back to default (double-buffered) specs.
        call = _build_infonce_call(B, D, num_chunks, chunk_size, feature_dtype,
                                   inv_temperature, single_buffer=False)
        row_loss, row_valid = call(feats, lab_col, lab_row)

    total_loss = jnp.sum(row_loss)
    total_pairs = jnp.sum(row_valid)
    mean_loss = total_loss / (total_pairs + 1e-8)
    if reduction == 'mean':
        loss = mean_loss
    elif reduction == 'sum':
        loss = mean_loss * total_pairs
    else:
        loss = mean_loss
    return {
        'loss': loss,
        'num_pairs': total_pairs.astype(jnp.int32),
        'mean_loss': mean_loss,
    }


def infonce_ref(features, labels, *, temperature=0.07, reduction='mean',
                chunk_size=256):
    """Pure-JAX reference mirroring the PyTorch forward (for verification)."""
    feats = features / jnp.maximum(
        jnp.linalg.norm(features, axis=1, keepdims=True), 1e-12)
    B = feats.shape[0]
    temp = max(float(temperature), 1e-4)
    total_loss = jnp.float32(0.0)
    total_pairs = jnp.float32(0.0)
    for s in range(0, B, chunk_size):
        e = min(s + chunk_size, B)
        C = e - s
        cf = jnp.clip(feats[s:e], -1000.0, 1000.0)
        ff = jnp.clip(feats, -1000.0, 1000.0)
        sim = (cf @ ff.T) / temp
        mask_self = jnp.ones((C, B), bool).at[jnp.arange(C),
                                              s + jnp.arange(C)].set(False)
        mask_pos = (labels[s:e, None] == labels[None, :]) & mask_self
        mask_pos = jnp.where(jnp.any(mask_pos), mask_pos, mask_self)
        sim_max = sim.max(axis=1, keepdims=True)
        sim = jnp.clip(sim - sim_max, -1000.0, 1000.0)
        exp_sim = jnp.maximum(jnp.exp(sim), 1e-8) * mask_self
        lse = jnp.log(exp_sim.sum(axis=1, keepdims=True) + 1e-8)
        log_prob = jnp.maximum(sim - lse, -1000.0)
        pos_pairs = mask_pos.sum(axis=1).astype(jnp.float32)
        chunk_loss = -(mask_pos * log_prob).sum(axis=1)
        valid = pos_pairs > 0
        chunk_loss = jnp.where(valid, chunk_loss / jnp.where(valid, pos_pairs, 1.0), 0.0)
        total_loss = total_loss + chunk_loss.sum()
        total_pairs = total_pairs + valid.sum().astype(jnp.float32)
    mean_loss = total_loss / (total_pairs + 1e-8)
    loss = mean_loss if reduction == 'mean' else mean_loss * total_pairs
    return {'loss': loss, 'num_pairs': total_pairs, 'mean_loss': mean_loss}


if __name__ == "__main__":
    key = jax.random.PRNGKey(0)
    k_feat, k_lab = jax.random.split(key)
    B, D, CHUNK = 16, 128, 8   # 2 chunks -> exercises the chunked grid path
    features = jax.random.normal(k_feat, (B, D), dtype=jnp.float32)
    labels = jax.random.randint(k_lab, (B,), 0, 4, dtype=jnp.int32)

    ref = infonce_ref(features, labels, temperature=0.07,
                      reduction='mean', chunk_size=CHUNK)
    ref_loss = float(ref['loss'])

    # f32 MXU feed: tight check against the PyTorch-mirroring reference.
    out32 = infonce_loss(features, labels, temperature=0.07, reduction='mean',
                         chunk_size=CHUNK, feature_dtype=jnp.float32)
    jax.block_until_ready(out32['loss'])
    assert abs(float(out32['loss']) - ref_loss) < 1e-3, \
        (float(out32['loss']), ref_loss)
    assert int(out32['num_pairs']) == int(ref['num_pairs'])

    # bf16 MXU feed (default): looser tolerance for the bf16 feature cast.
    out16 = infonce_loss(features, labels, temperature=0.07, reduction='mean',
                         chunk_size=CHUNK)
    jax.block_until_ready(out16['loss'])
    assert abs(float(out16['loss']) - ref_loss) < 0.1 + 0.02 * abs(ref_loss), \
        (float(out16['loss']), ref_loss)
    assert int(out16['num_pairs']) == int(ref['num_pairs'])

    print("KERNEL_OK")
</pallas_src>

<mosaic_0001>
module attributes {stable_mosaic.version = 11 : i64} {
  func.func @_infonce_kernel(%arg0: i32, %arg1: memref<16x128xf32, #tpu.memory_space<vmem>>, %arg2: memref<8x1xi32, #tpu.memory_space<vmem>>, %arg3: memref<1x16xi32, #tpu.memory_space<vmem>>, %arg4: memref<8x1xf32, #tpu.memory_space<vmem>>, %arg5: memref<8x1xf32, #tpu.memory_space<vmem>>) attributes {dimension_semantics = [#tpu.dimension_semantics<parallel>], iteration_bounds = array<i64: 2>, scalar_prefetch = 0 : i64, scratch_operands = 0 : i64, tpu.core_type = #tpu.core_type<tc>, window_params = [{pipeline_mode = #tpu.pipeline_mode<synchronous>, transform_indices = @transform_0, window_bounds = array<i64: 16, 128>}, {transform_indices = @transform_1, window_bounds = array<i64: 8, 1>}, {pipeline_mode = #tpu.pipeline_mode<synchronous>, transform_indices = @transform_2, window_bounds = array<i64: 1, 16>}, {transform_indices = @transform_3, window_bounds = array<i64: 8, 1>}, {transform_indices = @transform_4, window_bounds = array<i64: 8, 1>}]} {
    %c8_i32 = arith.constant 8 : i32
    %0 = arith.muli %arg0, %c8_i32 : i32
    %1 = tpu.assume_multiple %0, 8 : i32
    %2 = arith.index_cast %1 : i32 to index
    %c0 = arith.constant 0 : index
    %3 = vector.load %arg1[%2, %c0] : memref<16x128xf32, #tpu.memory_space<vmem>>, vector<8x128xf32>
    %c0_0 = arith.constant 0 : index
    %c0_1 = arith.constant 0 : index
    %4 = vector.load %arg1[%c0_0, %c0_1] : memref<16x128xf32, #tpu.memory_space<vmem>>, vector<16x128xf32>
    %cst = arith.constant dense<0.000000e+00> : vector<8x16xf32>
    %5 = tpu.matmul %3, %4, %cst {dimension_numbers = #tpu.dot_dimension_numbers<[1], [1], [0], [0], [0, 0, 1, 0], [], []>} : vector<8x128xf32>, vector<16x128xf32>, vector<8x16xf32> -> vector<8x16xf32>
    %6 = tpu.iota {dimensions = array<i32: 0>} : vector<8x16xi32>
    %7 = tpu.iota {dimensions = array<i32: 1>} : vector<8x16xi32>
    %8 = vector.broadcast %1 : i32 to vector<8x16xi32>
    %9 = arith.addi %6, %8 : vector<8x16xi32>
    %10 = arith.cmpi ne, %7, %9 : vector<8x16xi32>
    %11 = arith.extui %10 : vector<8x16xi1> to vector<8x16xi32>
    %12 = arith.sitofp %11 : vector<8x16xi32> to vector<8x16xf32>
    %c0_2 = arith.constant 0 : index
    %c0_3 = arith.constant 0 : index
    %13 = vector.load %arg2[%c0_2, %c0_3] : memref<8x1xi32, #tpu.memory_space<vmem>>, vector<8x1xi32>
    %c0_4 = arith.constant 0 : index
    %c0_5 = arith.constant 0 : index
    %14 = vector.load %arg3[%c0_4, %c0_5] : memref<1x16xi32, #tpu.memory_space<vmem>>, vector<1x16xi32>
    %15 = vector.broadcast %13 : vector<8x1xi32> to vector<8x16xi32>
    %16 = vector.broadcast %14 : vector<1x16xi32> to vector<8x16xi32>
    %17 = arith.cmpi eq, %15, %16 : vector<8x16xi32>
    %18 = arith.andi %17, %10 : vector<8x16xi1>
    %19 = arith.extui %18 : vector<8x16xi1> to vector<8x16xi32>
    %20 = arith.sitofp %19 : vector<8x16xi32> to vector<8x16xf32>
    %cst_6 = arith.constant 14.2857141 : f32
    %21 = vector.broadcast %cst_6 : f32 to vector<8x16xf32>
    %22 = arith.subf %5, %21 : vector<8x16xf32>
    %23 = math.exp %22 : vector<8x16xf32>
    %cst_7 = arith.constant 9.99999993E-9 : f32
    %24 = vector.broadcast %cst_7 : f32 to vector<8x16xf32>
    %25 = arith.maximumf %23, %24 : vector<8x16xf32>
    %26 = arith.mulf %25, %12 : vector<8x16xf32>
    %cst_8 = arith.constant dense<0.000000e+00> : vector<8xf32>
    %27 = vector.multi_reduction <add>, %26, %cst_8 [1] : vector<8x16xf32> to vector<8xf32>
    %28 = vector.shape_cast %27 : vector<8xf32> to vector<8x1xf32>
    %cst_9 = arith.constant 9.99999993E-9 : f32
    %29 = vector.broadcast %cst_9 : f32 to vector<8x1xf32>
    %30 = arith.addf %28, %29 : vector<8x1xf32>
    %31 = math.log %30 : vector<8x1xf32>
    %cst_10 = arith.constant dense<0.000000e+00> : vector<8xf32>
    %32 = vector.multi_reduction <add>, %20, %cst_10 [1] : vector<8x16xf32> to vector<8xf32>
    %33 = vector.shape_cast %32 : vector<8xf32> to vector<8x1xf32>
    %34 = arith.mulf %20, %22 : vector<8x16xf32>
    %cst_11 = arith.constant dense<0.000000e+00> : vector<8xf32>
    %35 = vector.multi_reduction <add>, %34, %cst_11 [1] : vector<8x16xf32> to vector<8xf32>
    %36 = vector.shape_cast %35 : vector<8xf32> to vector<8x1xf32>
    %37 = arith.mulf %12, %22 : vector<8x16xf32>
    %cst_12 = arith.constant dense<0.000000e+00> : vector<8xf32>
    %38 = vector.multi_reduction <add>, %37, %cst_12 [1] : vector<8x16xf32> to vector<8xf32>
    %39 = vector.shape_cast %38 : vector<8xf32> to vector<8x1xf32>
    %40 = vector.shape_cast %33 : vector<8x1xf32> to vector<1x8x1xf32>
    %cst_13 = arith.constant dense<0.000000e+00> : vector<1xf32>
    %41 = vector.multi_reduction <add>, %40, %cst_13 [1, 2] : vector<1x8x1xf32> to vector<1xf32>
    %42 = vector.shape_cast %41 : vector<1xf32> to vector<1x1x1xf32>
    %43 = vector.extract %42[0, 0, 0] : f32 from vector<1x1x1xf32>
    %cst_14 = arith.constant 0.000000e+00 : f32
    %44 = arith.cmpf ogt, %43, %cst_14 : f32
    %cst_15 = arith.constant 1.500000e+01 : f32
    %45 = vector.broadcast %cst_15 : f32 to vector<8x1xf32>
    %46 = arith.select %44, %33, %45 : vector<8x1xf32>
    %47 = arith.select %44, %36, %39 : vector<8x1xf32>
    %cst_16 = arith.constant 0.000000e+00 : f32
    %48 = vector.broadcast %cst_16 : f32 to vector<8x1xf32>
    %49 = arith.cmpf ogt, %46, %48 : vector<8x1xf32>
    %50 = arith.extui %49 : vector<8x1xi1> to vector<8x1xi32>
    %51 = arith.sitofp %50 : vector<8x1xi32> to vector<8x1xf32>
    %52 = arith.mulf %46, %31 : vector<8x1xf32>
    %53 = arith.subf %52, %47 : vector<8x1xf32>
    %54 = arith.mulf %51, %53 : vector<8x1xf32>
    %cst_17 = arith.constant 1.000000e+00 : f32
    %55 = vector.broadcast %cst_17 : f32 to vector<8x1xf32>
    %56 = arith.maximumf %46, %55 : vector<8x1xf32>
    %57 = arith.divf %54, %56 : vector<8x1xf32>
    %c0_18 = arith.constant 0 : index
    %c0_19 = arith.constant 0 : index
    %58 = vector.load %arg4[%c0_18, %c0_19] : memref<8x1xf32, #tpu.memory_space<vmem>>, vector<8x1xf32>
    tpu.vector_store %arg4[%c0_18, %c0_19], %57 {strides = array<i32>} : memref<8x1xf32, #tpu.memory_space<vmem>>, vector<8x1xf32>,
    %c0_20 = arith.constant 0 : index
    %c0_21 = arith.constant 0 : index
    %59 = vector.load %arg5[%c0_20, %c0_21] : memref<8x1xf32, #tpu.memory_space<vmem>>, vector<8x1xf32>
    tpu.vector_store %arg5[%c0_20, %c0_21], %51 {strides = array<i32>} : memref<8x1xf32, #tpu.memory_space<vmem>>, vector<8x1xf32>,
    return
  }
  func.func @transform_0(%arg0: i32) -> (i32, i32) {
    %c0_i32 = arith.constant 0 : i32
    %c0_i32_0 = arith.constant 0 : i32
    %c0_i32_1 = arith.constant 0 : i32
    return %c0_i32, %c0_i32_0 : i32, i32
  }
  func.func @transform_1(%arg0: i32) -> (i32, i32) {
    %c0_i32 = arith.constant 0 : i32
    %c0_i32_0 = arith.constant 0 : i32
    return %arg0, %c0_i32 : i32, i32
  }
  func.func @transform_2(%arg0: i32) -> (i32, i32) {
    %c0_i32 = arith.constant 0 : i32
    %c0_i32_0 = arith.constant 0 : i32
    %c0_i32_1 = arith.constant 0 : i32
    return %c0_i32, %c0_i32_0 : i32, i32
  }
  func.func @transform_3(%arg0: i32) -> (i32, i32) {
    %c0_i32 = arith.constant 0 : i32
    %c0_i32_0 = arith.constant 0 : i32
    return %arg0, %c0_i32 : i32, i32
  }
  func.func @transform_4(%arg0: i32) -> (i32, i32) {
    %c0_i32 = arith.constant 0 : i32
    %c0_i32_0 = arith.constant 0 : i32
    return %arg0, %c0_i32 : i32, i32
  }
}

module attributes {stable_mosaic.version = 11 : i64} {
  func.func @_infonce_kernel(%arg0: i32, %arg1: memref<16x128xf32, #tpu.memory_space<vmem>>, %arg2: memref<8x1xi32, #tpu.memory_space<vmem>>, %arg3: memref<1x16xi32, #tpu.memory_space<vmem>>, %arg4: memref<8x1xf32, #tpu.memory_space<vmem>>, %arg5: memref<8x1xf32, #tpu.memory_space<vmem>>) attributes {dimension_semantics = [#tpu.dimension_semantics<parallel>], iteration_bounds = array<i64: 2>, scalar_prefetch = 0 : i64, scratch_operands = 0 : i64, tpu.core_type = #tpu.core_type<tc>, window_params = [{pipeline_mode = #tpu.pipeline_mode<synchronous>, transform_indices = @transform_0, window_bounds = array<i64: 16, 128>}, {transform_indices = @transform_1, window_bounds = array<i64: 8, 1>}, {pipeline_mode = #tpu.pipeline_mode<synchronous>, transform_indices = @transform_2, window_bounds = array<i64: 1, 16>}, {transform_indices = @transform_3, window_bounds = array<i64: 8, 1>}, {transform_indices = @transform_4, window_bounds = array<i64: 8, 1>}]} {
    %c8_i32 = arith.constant 8 : i32
    %0 = arith.muli %arg0, %c8_i32 : i32
    %1 = tpu.assume_multiple %0, 8 : i32
    %2 = arith.index_cast %1 : i32 to index
    %c0 = arith.constant 0 : index
    %3 = vector.load %arg1[%2, %c0] : memref<16x128xf32, #tpu.memory_space<vmem>>, vector<8x128xf32>
    %c0_0 = arith.constant 0 : index
    %c0_1 = arith.constant 0 : index
    %4 = vector.load %arg1[%c0_0, %c0_1] : memref<16x128xf32, #tpu.memory_space<vmem>>, vector<16x128xf32>
    %cst = arith.constant dense<0.000000e+00> : vector<8x16xf32>
    %5 = tpu.matmul %3, %4, %cst {dimension_numbers = #tpu.dot_dimension_numbers<[1], [1], [0], [0], [0, 0, 1, 0], [], []>} : vector<8x128xf32>, vector<16x128xf32>, vector<8x16xf32> -> vector<8x16xf32>
    %6 = tpu.iota {dimensions = array<i32: 0>} : vector<8x16xi32>
    %7 = tpu.iota {dimensions = array<i32: 1>} : vector<8x16xi32>
    %8 = vector.broadcast %1 : i32 to vector<8x16xi32>
    %9 = arith.addi %6, %8 : vector<8x16xi32>
    %10 = arith.cmpi ne, %7, %9 : vector<8x16xi32>
    %11 = arith.extui %10 : vector<8x16xi1> to vector<8x16xi32>
    %12 = arith.sitofp %11 : vector<8x16xi32> to vector<8x16xf32>
    %c0_2 = arith.constant 0 : index
    %c0_3 = arith.constant 0 : index
    %13 = vector.load %arg2[%c0_2, %c0_3] : memref<8x1xi32, #tpu.memory_space<vmem>>, vector<8x1xi32>
    %c0_4 = arith.constant 0 : index
    %c0_5 = arith.constant 0 : index
    %14 = vector.load %arg3[%c0_4, %c0_5] : memref<1x16xi32, #tpu.memory_space<vmem>>, vector<1x16xi32>
    %15 = vector.broadcast %13 : vector<8x1xi32> to vector<8x16xi32>
    %16 = vector.broadcast %14 : vector<1x16xi32> to vector<8x16xi32>
    %17 = arith.cmpi eq, %15, %16 : vector<8x16xi32>
    %18 = arith.andi %17, %10 : vector<8x16xi1>
    %19 = arith.extui %18 : vector<8x16xi1> to vector<8x16xi32>
    %20 = arith.sitofp %19 : vector<8x16xi32> to vector<8x16xf32>
    %cst_6 = arith.constant 14.2857141 : f32
    %21 = vector.broadcast %cst_6 : f32 to vector<8x16xf32>
    %22 = arith.subf %5, %21 : vector<8x16xf32>
    %23 = math.exp %22 : vector<8x16xf32>
    %cst_7 = arith.constant 9.99999993E-9 : f32
    %24 = vector.broadcast %cst_7 : f32 to vector<8x16xf32>
    %25 = arith.maximumf %23, %24 : vector<8x16xf32>
    %26 = arith.mulf %25, %12 : vector<8x16xf32>
    %cst_8 = arith.constant dense<0.000000e+00> : vector<8xf32>
    %27 = vector.multi_reduction <add>, %26, %cst_8 [1] : vector<8x16xf32> to vector<8xf32>
    %28 = vector.shape_cast %27 : vector<8xf32> to vector<8x1xf32>
    %cst_9 = arith.constant 9.99999993E-9 : f32
    %29 = vector.broadcast %cst_9 : f32 to vector<8x1xf32>
    %30 = arith.addf %28, %29 : vector<8x1xf32>
    %31 = math.log %30 : vector<8x1xf32>
    %cst_10 = arith.constant dense<0.000000e+00> : vector<8xf32>
    %32 = vector.multi_reduction <add>, %20, %cst_10 [1] : vector<8x16xf32> to vector<8xf32>
    %33 = vector.shape_cast %32 : vector<8xf32> to vector<8x1xf32>
    %34 = arith.mulf %20, %22 : vector<8x16xf32>
    %cst_11 = arith.constant dense<0.000000e+00> : vector<8xf32>
    %35 = vector.multi_reduction <add>, %34, %cst_11 [1] : vector<8x16xf32> to vector<8xf32>
    %36 = vector.shape_cast %35 : vector<8xf32> to vector<8x1xf32>
    %37 = arith.mulf %12, %22 : vector<8x16xf32>
    %cst_12 = arith.constant dense<0.000000e+00> : vector<8xf32>
    %38 = vector.multi_reduction <add>, %37, %cst_12 [1] : vector<8x16xf32> to vector<8xf32>
    %39 = vector.shape_cast %38 : vector<8xf32> to vector<8x1xf32>
    %40 = vector.shape_cast %33 : vector<8x1xf32> to vector<1x8x1xf32>
    %cst_13 = arith.constant dense<0.000000e+00> : vector<1xf32>
    %41 = vector.multi_reduction <add>, %40, %cst_13 [1, 2] : vector<1x8x1xf32> to vector<1xf32>
    %42 = vector.shape_cast %41 : vector<1xf32> to vector<1x1x1xf32>
    %43 = vector.extract %42[0, 0, 0] : f32 from vector<1x1x1xf32>
    %cst_14 = arith.constant 0.000000e+00 : f32
    %44 = arith.cmpf ogt, %43, %cst_14 : f32
    %cst_15 = arith.constant 1.500000e+01 : f32
    %45 = vector.broadcast %cst_15 : f32 to vector<8x1xf32>
    %46 = arith.select %44, %33, %45 : vector<8x1xf32>
    %47 = arith.select %44, %36, %39 : vector<8x1xf32>
    %cst_16 = arith.constant 0.000000e+00 : f32
    %48 = vector.broadcast %cst_16 : f32 to vector<8x1xf32>
    %49 = arith.cmpf ogt, %46, %48 : vector<8x1xf32>
    %50 = arith.extui %49 : vector<8x1xi1> to vector<8x1xi32>
    %51 = arith.sitofp %50 : vector<8x1xi32> to vector<8x1xf32>
    %52 = arith.mulf %46, %31 : vector<8x1xf32>
    %53 = arith.subf %52, %47 : vector<8x1xf32>
    %54 = arith.mulf %51, %53 : vector<8x1xf32>
    %cst_17 = arith.constant 1.000000e+00 : f32
    %55 = vector.broadcast %cst_17 : f32 to vector<8x1xf32>
    %56 = arith.maximumf %46, %55 : vector<8x1xf32>
    %57 = arith.divf %54, %56 : vector<8x1xf32>
    %c0_18 = arith.constant 0 : index
    %c0_19 = arith.constant 0 : index
    %58 = vector.load %arg4[%c0_18, %c0_19] : memref<8x1xf32, #tpu.memory_space<vmem>>, vector<8x1xf32>
    tpu.vector_store %arg4[%c0_18, %c0_19], %57 {strides = array<i32>} : memref<8x1xf32, #tpu.memory_space<vmem>>, vector<8x1xf32>,
    %c0_20 = arith.constant 0 : index
    %c0_21 = arith.constant 0 : index
    %59 = vector.load %arg5[%c0_20, %c0_21] : memref<8x1xf32, #tpu.memory_space<vmem>>, vector<8x1xf32>
    tpu.vector_store %arg5[%c0_20, %c0_21], %51 {strides = array<i32>} : memref<8x1xf32, #tpu.memory_space<vmem>>, vector<8x1xf32>,
    return
  }
  func.func @transform_0(%arg0: i32) -> (i32, i32) {
    %c0_i32 = arith.constant 0 : i32
    %c0_i32_0 = arith.constant 0 : i32
    %c0_i32_1 = arith.constant 0 : i32
    return %c0_i32, %c0_i32_0 : i32, i32
  }
  func.func @transform_1(%arg0: i32) -> (i32, i32) {
    %c0_i32 = arith.constant 0 : i32
    %c0_i32_0 = arith.constant 0 : i32
    return %arg0, %c0_i32 : i32, i32
  }
  func.func @transform_2(%arg0: i32) -> (i32, i32) {
    %c0_i32 = arith.constant 0 : i32
    %c0_i32_0 = arith.constant 0 : i32
    %c0_i32_1 = arith.constant 0 : i32
    return %c0_i32, %c0_i32_0 : i32, i32
  }
  func.func @transform_3(%arg0: i32) -> (i32, i32) {
    %c0_i32 = arith.constant 0 : i32
    %c0_i32_0 = arith.constant 0 : i32
    return %arg0, %c0_i32 : i32, i32
  }
  func.func @transform_4(%arg0: i32) -> (i32, i32) {
    %c0_i32 = arith.constant 0 : i32
    %c0_i32_0 = arith.constant 0 : i32
    return %arg0, %c0_i32 : i32, i32
  }
}

</mosaic_0001>

<llo_original>
// kernel: tpu_custom_call.1
$region0: #{tpu_custom_call.1}
  #allocation0 [shape = 'u32[]', space=smem, size = 0x4, offset = 0x4, fixed_abs, tag = 'smem constant byte address 0x4 - core index']
  #allocation1 [shape = 'u32[144,128]{1,0:T(1,128)}', space=vmem, size = 0x12000, scoped, tag = 'internal scratch']
  %s0 = inlined_call_operand.hbm [shape: f32[16,128], index: 0, kind: input, shape index: {}]
  %s1 = inlined_call_operand.hbm [shape: s32[16,1], index: 1, kind: input, shape index: {}]
  %s2 = inlined_call_operand.hbm [shape: s32[1,16], index: 2, kind: input, shape index: {}]
  %s3 = inlined_call_operand.hbm [shape: f32[16,1], index: 3, kind: output, shape index: {0}]
  %s4 = inlined_call_operand.hbm [shape: f32[16,1], index: 4, kind: output, shape index: {1}]
  %5 = xla_tuple %s3, %s4
  %s6 = sld [smem:[#allocation0]]
  $region65: #{tpu_custom_call.1} parent=0
    _
  %s8 = ssub.s32 1, %s6
  %s9 = scalar_select 0, %s8, %s6
  $region1: #{tpu_custom_call.1} parent=0
    #allocation2 [shape = 'u8[8192]{0}', space=vmem, size = 0x2000, scoped, tag = 'input window, operand 0, single buffered']
    #allocation3 [shape = 's32[2]{0}', space=sflag, size = 0x8, scoped, tag = 'scoped memory for tpu_custom_call.1']
    #allocation4 [shape = 's32[2]{0}', space=sflag, size = 0x8, scoped, tag = 'scoped memory for tpu_custom_call.1']
    #allocation5 [shape = 'u8[8192]{0}', space=vmem, size = 0x2000, scoped, tag = 'input window, operand 1']
    #allocation6 [shape = 's32[2]{0}', space=sflag, size = 0x8, scoped, tag = 'scoped memory for tpu_custom_call.1']
    #allocation7 [shape = 'u8[512]{0}', space=vmem, size = 0x400, scoped, tag = 'input window, operand 2, single buffered']
    #allocation8 [shape = 'u8[8192]{0}', space=vmem, size = 0x2000, scoped, tag = 'output window, operand 0']
    #allocation9 [shape = 'u8[8192]{0}', space=vmem, size = 0x2000, scoped, tag = 'output window, operand 1']
    #allocation10 [shape = 's32[2]{0}', space=sflag, size = 0x8, scoped, tag = 'scoped memory for tpu_custom_call.1']
    %10 = vsyncpa [#allocation3], 0
    %11 = vsyncpa [#allocation6], 0
    %s12 = scalar_lea.sflag [#allocation6], 1
    %13 = vsyncpa %s12, 0
    %14 = vsyncpa [#allocation4], 0
    %s15 = scalar_lea.sflag [#allocation4], 1
    %16 = vsyncpa %s15, 0
    %17 = vsyncpa [#allocation10], 0
    %s18 = scalar_lea.sflag [#allocation10], 1
    %19 = vsyncpa %s18, 0
    loop: start=0, step=1, limit=4
    $region2: #{tpu_custom_call.1} parent=1 // loop_pre_header
      _
    $region3: #{tpu_custom_call.1} parent=1 // loop_header
      %s21 = sphi 0, %s25
      %p22 = scmp.ge.s32.totalorder %s21, 4
      %s29 = sphi 0, %s29
      %s31 = sphi 0, %s29
      %s32 = sphi 0, %s31
      %s46 = sphi 0, %s32
      %s52 = sphi 0, %s54
      %s55 = sphi 0, %s52
      %s56 = sphi 0, %s55
      %s72 = sphi 0, %s56
      %s76 = sphi 0, %s76
      %s78 = sphi 0, %s76
      %s79 = sphi 0, %s78
      %s93 = sphi 0, %s79
      %s99 = sphi 0, %s101
      %s102 = sphi 0, %s99
      %s103 = sphi 0, %s102
      %s119 = sphi 0, %s103
      %s125 = sphi 0, %s127
      %s128 = sphi 0, %s125
      %s129 = sphi 0, %s128
      %s145 = sphi 0, %s129
    $region4: #{tpu_custom_call.1} parent=1 // loop_header_branch
      %24 = sbr.rel (%p22) target = $region8
    $region5: #{tpu_custom_call.1} parent=1 // loop_body
      %s26 = ssub.s32 %s21, 1
      %s27 = ssub.s32 %s21, 2
      %s28 = sadd.s32 %s21, 1
      %s30 = sadd.s32 %s29, 1
      %p33 = scmp.eq.s32.totalorder %s21, 1
      %p34 = scmp.ne.s32.totalorder %s29, %s31
      %p35 = scmp.eq.s32.totalorder %s21, 0
      %p36 = por %p34, %p35
      %p37 = scmp.ne.s32.totalorder %s29, %s31
      %p38 = scmp.eq.s32.totalorder %s26, 1
      %p39 = por %p37, %p38
      %p40 = scmp.ne.s32.totalorder %s31, %s32
      %p41 = scmp.eq.s32.totalorder %s26, 0
      %p42 = por %p40, %p41
      %p43 = scmp.ne.s32.totalorder %s31, %s32
      %p44 = scmp.eq.s32.totalorder %s27, 1
      %p45 = por %p43, %p44
      %p47 = scmp.ne.s32.totalorder %s32, %s46
      %p48 = scmp.eq.s32.totalorder %s27, 0
      %p49 = por %p47, %p48
      %s50 = ssub.s32 %s21, %s28
      %p51 = scmp.eq.s32.totalorder %s50, 0
      %s53 = sadd.s32 %s52, 1
      %s54 = scalar_select %p51, %s52, %s53
      %p57 = pneg %p51
      %p58 = scmp.eq.s32.totalorder %s21, 1
      %p59 = por %p57, %p58
      %p60 = scmp.ne.s32.totalorder %s52, %s55
      %p61 = scmp.eq.s32.totalorder %s21, 0
      %p62 = por %p60, %p61
      %p63 = scmp.ne.s32.totalorder %s52, %s55
      %p64 = scmp.eq.s32.totalorder %s26, 1
      %p65 = por %p63, %p64
      %p66 = scmp.ne.s32.totalorder %s55, %s56
      %p67 = scmp.eq.s32.totalorder %s26, 0
      %p68 = por %p66, %p67
      %p69 = scmp.ne.s32.totalorder %s55, %s56
      %p70 = scmp.eq.s32.totalorder %s27, 1
      %p71 = por %p69, %p70
      %p73 = scmp.ne.s32.totalorder %s56, %s72
      %p74 = scmp.eq.s32.totalorder %s27, 0
      %p75 = por %p73, %p74
      %s77 = sadd.s32 %s76, 1
      %p80 = scmp.eq.s32.totalorder %s21, 1
      %p81 = scmp.ne.s32.totalorder %s76, %s78
      %p82 = scmp.eq.s32.totalorder %s21, 0
      %p83 = por %p81, %p82
      %p84 = scmp.ne.s32.totalorder %s76, %s78
      %p85 = scmp.eq.s32.totalorder %s26, 1
      %p86 = por %p84, %p85
      %p87 = scmp.ne.s32.totalorder %s78, %s79
      %p88 = scmp.eq.s32.totalorder %s26, 0
      %p89 = por %p87, %p88
      %p90 = scmp.ne.s32.totalorder %s78, %s79
      %p91 = scmp.eq.s32.totalorder %s27, 1
      %p92 = por %p90, %p91
      %p94 = scmp.ne.s32.totalorder %s79, %s93
      %p95 = scmp.eq.s32.totalorder %s27, 0
      %p96 = por %p94, %p95
      %s97 = ssub.s32 %s21, %s28
      %p98 = scmp.eq.s32.totalorder %s97, 0
      %s100 = sadd.s32 %s99, 1
      %s101 = scalar_select %p98, %s99, %s100
      %p104 = pneg %p98
      %p105 = scmp.eq.s32.totalorder %s21, 1
      %p106 = por %p104, %p105
      %p107 = scmp.ne.s32.totalorder %s99, %s102
      %p108 = scmp.eq.s32.totalorder %s21, 0
      %p109 = por %p107, %p108
      %p110 = scmp.ne.s32.totalorder %s99, %s102
      %p111 = scmp.eq.s32.totalorder %s26, 1
      %p112 = por %p110, %p111
      %p113 = scmp.ne.s32.totalorder %s102, %s103
      %p114 = scmp.eq.s32.totalorder %s26, 0
      %p115 = por %p113, %p114
      %p116 = scmp.ne.s32.totalorder %s102, %s103
      %p117 = scmp.eq.s32.totalorder %s27, 1
      %p118 = por %p116, %p117
      %p120 = scmp.ne.s32.totalorder %s103, %s119
      %p121 = scmp.eq.s32.totalorder %s27, 0
      %p122 = por %p120, %p121
      %s123 = ssub.s32 %s21, %s28
      %p124 = scmp.eq.s32.totalorder %s123, 0
      %s126 = sadd.s32 %s125, 1
      %s127 = scalar_select %p124, %s125, %s126
      %p130 = pneg %p124
      %p131 = scmp.eq.s32.totalorder %s21, 1
      %p132 = por %p130, %p131
      %p133 = scmp.ne.s32.totalorder %s125, %s128
      %p134 = scmp.eq.s32.totalorder %s21, 0
      %p135 = por %p133, %p134
      %p136 = scmp.ne.s32.totalorder %s125, %s128
      %p137 = scmp.eq.s32.totalorder %s26, 1
      %p138 = por %p136, %p137
      %p139 = scmp.ne.s32.totalorder %s128, %s129
      %p140 = scmp.eq.s32.totalorder %s26, 0
      %p141 = por %p139, %p140
      %p142 = scmp.ne.s32.totalorder %s128, %s129
      %p143 = scmp.eq.s32.totalorder %s27, 1
      %p144 = por %p142, %p143
      %p146 = scmp.ne.s32.totalorder %s129, %s145
      %p147 = scmp.eq.s32.totalorder %s27, 0
      %p148 = por %p146, %p147
      %p149 = scmp.le.s32.totalorder 1, %s21
      %p150 = scmp.lt.s32.totalorder %s21, 3
      %p151 = pnand %p149, %p150
      %p152 = pneg %p151
      // Predicated region
      $region9: #{tpu_custom_call.1} parent=5 // pred_check
        _
      $region10: #{tpu_custom_call.1} parent=5 // pred_check_branch
        %154 = sbr.rel (%p151) target = $region12
      $region11: #{tpu_custom_call.1} parent=5 // pred_region
        %s155 = ssub.s32 %s21, 1
        // Predicated region
        $region13: #{tpu_custom_call.1} parent=11 // pred_check
          %p156 = pneg %p42
        $region14: #{tpu_custom_call.1} parent=11 // pred_check_branch
          %158 = sbr.rel (%p156) target = $region16
        $region15: #{tpu_custom_call.1} parent=11 // pred_region
          %s160 = ssub.s32 256, 256
          %161 = vsyncadd [#allocation3], %s160
          %s162 = sshll.u32 [#allocation2], 4
          %s163 = int_to_ptr.vmem [resolvable:$true] %s162
          %168 = dma.hbm_to_vmem [thread:$0]  %s0, 256, %s163, [#allocation3], 128, 128, 8
        $region16: #{tpu_custom_call.1} parent=11 // pred_fallthru
          _
        // Predicated region
        $region17: #{tpu_custom_call.1} parent=11 // pred_check
          %p169 = pneg %p89
        $region18: #{tpu_custom_call.1} parent=11 // pred_check_branch
          %171 = sbr.rel (%p169) target = $region20
        $region19: #{tpu_custom_call.1} parent=11 // pred_region
          %s173 = ssub.s32 16, 16
          %174 = vsyncadd [#allocation6], %s173
          %s176 = sshll.u32 [#allocation7], 4
          %s177 = int_to_ptr.vmem [resolvable:$true] %s176
          %179 = dma.hbm_to_vmem [thread:$0]  %s2, 16, %s177, [#allocation6]
        $region20: #{tpu_custom_call.1} parent=11 // pred_fallthru
          _
      $region12: #{tpu_custom_call.1} parent=5 // pred_fallthru
        _
      %p180 = scmp.lt.s32.totalorder %s21, 2
      // Predicated region
      $region21: #{tpu_custom_call.1} parent=5 // pred_check
        %p181 = pneg %p180
      $region22: #{tpu_custom_call.1} parent=5 // pred_check_branch
        %183 = sbr.rel (%p181) target = $region24
      $region23: #{tpu_custom_call.1} parent=5 // pred_region
        // Predicated region
        $region25: #{tpu_custom_call.1} parent=23 // pred_check
          %p184 = pneg %p62
        $region26: #{tpu_custom_call.1} parent=23 // pred_check_branch
          %186 = sbr.rel (%p184) target = $region28
        $region27: #{tpu_custom_call.1} parent=23 // pred_region
          %s187 = sand.u32 %s21, 1
          %s188 = scalar_lea.sflag [#allocation6], %s187
          %s189 = sand.u32 %s52, 1
          %s190 = smul.addr %s189, 8
          %s191 = scalar_lea.vmem [#allocation5], %s190
          %s193 = ssub.s32 128, 128
          %194 = vsyncadd %s188, %s193
          %s195 = smul.addr %s21, 128
          %s196 = scalar_lea.hbm %s1, %s195
          %s198 = sshll.u32 %s191, 4
          %s199 = int_to_ptr.vmem [resolvable:$true] %s198
          %201 = dma.hbm_to_vmem [thread:$0]  %s196, 128, %s199, %s188
        $region28: #{tpu_custom_call.1} parent=23 // pred_fallthru
          _
      $region24: #{tpu_custom_call.1} parent=5 // pred_fallthru
        _
      %p202 = scmp.le.s32.totalorder 1, %s21
      %p203 = scmp.lt.s32.totalorder %s21, 3
      %p204 = pnand %p202, %p203
      %p205 = pneg %p204
      // Predicated region
      $region29: #{tpu_custom_call.1} parent=5 // pred_check
        _
      $region30: #{tpu_custom_call.1} parent=5 // pred_check_branch
        %207 = sbr.rel (%p204) target = $region32
      $region31: #{tpu_custom_call.1} parent=5 // pred_region
        %s208 = ssub.s32 %s21, 1
        // Predicated region
        $region33: #{tpu_custom_call.1} parent=31 // pred_check
          %p209 = pneg %p42
        $region34: #{tpu_custom_call.1} parent=31 // pred_check_branch
          %211 = sbr.rel (%p209) target = $region36
        $region35: #{tpu_custom_call.1} parent=31 // pred_region
          %212 = dma.done [#allocation3], 256
        $region36: #{tpu_custom_call.1} parent=31 // pred_fallthru
          _
        %s213 = sand.u32 %s26, 1
        %s214 = scalar_lea.sflag [#allocation6], %s213
        %s215 = sand.u32 %s55, 1
        %s216 = smul.addr %s215, 8
        %s217 = scalar_lea.vmem [#allocation5], %s216
        // Predicated region
        $region37: #{tpu_custom_call.1} parent=31 // pred_check
          %p218 = pneg %p68
        $region38: #{tpu_custom_call.1} parent=31 // pred_check_branch
          %220 = sbr.rel (%p218) target = $region40
        $region39: #{tpu_custom_call.1} parent=31 // pred_region
          %221 = dma.done %s214, 128
        $region40: #{tpu_custom_call.1} parent=31 // pred_fallthru
          _
        // Predicated region
        $region41: #{tpu_custom_call.1} parent=31 // pred_check
          %p222 = pneg %p89
        $region42: #{tpu_custom_call.1} parent=31 // pred_check_branch
          %224 = sbr.rel (%p222) target = $region44
        $region43: #{tpu_custom_call.1} parent=31 // pred_region
          %225 = dma.done [#allocation6], 16
        $region44: #{tpu_custom_call.1} parent=31 // pred_fallthru
          _
        %p226 = pneg %p42
        %p227 = pneg %p39
        %s228 = sand.u32 %s26, 1
        %s229 = scalar_lea.sflag [#allocation6], %s228
        %s230 = sand.u32 %s55, 1
        %s231 = smul.addr %s230, 8
        %s232 = scalar_lea.vmem [#allocation5], %s231
        %p233 = pneg %p68
        %p234 = pneg %p65
        %p235 = pneg %p89
        %p236 = pneg %p86
        %p237 = pneg %p115
        %p238 = pneg %p112
        %s239 = sand.u32 %s102, 1
        %s240 = scalar_lea.sflag [#allocation4], %s239
        %s241 = sand.u32 %s102, 1
        %s242 = smul.addr %s241, 8
        %s243 = scalar_lea.vmem [#allocation8], %s242
        %p244 = pneg %p141
        %p245 = pneg %p138
        %s246 = sand.u32 %s128, 1
        %s247 = scalar_lea.sflag [#allocation10], %s246
        %s248 = sand.u32 %s128, 1
        %s249 = smul.addr %s248, 8
        %s250 = scalar_lea.vmem [#allocation9], %s249
        %s251 = smul.u32 %s26, 8
        %s252 = scalar_lea.vmem [#allocation2], %s251
        %v253 = vld [vmem:[%s252] sm:$0xff]
        %v254 = vld [vmem:[#allocation2] sm:$0xff]
        %v255 = vld [vmem:[#allocation2 + $0x8] sm:$0xff]
        %256 = vmatprep.subr.mxu0 0.0
        %257 = vmatpush1.xpose.msra.mxu0 %v254
        %258 = vmatprep.subr.mxu0 0.0
        %259 = vmatpush1.xpose.msra.mxu0 %v255
        %260 = vmatprep.subr.mxu0 0.0
        %261 = vmatpush1.xpose.msra.mxu0 0.0
        %262 = vmatprep.subr.mxu0 0.0
        %263 = vmatpush1.xpose.msra.mxu0 0.0
        %264 = vmatprep.subr.mxu0 0.0
        %265 = vmatpush1.xpose.msra.mxu0 0.0
        %266 = vmatprep.subr.mxu0 0.0
        %267 = vmatpush1.xpose.msra.mxu0 0.0
        %268 = vmatprep.subr.mxu0 0.0
        %269 = vmatpush1.xpose.msra.mxu0 0.0
        %270 = vmatprep.subr.mxu0 0.0
        %271 = vmatpush1.xpose.msra.mxu0 0.0
        %272 = vmatprep.subr.mxu0 0.0
        %273 = vmatpush1.xpose.msra.mxu0 0.0
        %274 = vmatprep.subr.mxu0 0.0
        %275 = vmatpush1.xpose.msra.mxu0 0.0
        %276 = vmatprep.subr.mxu0 0.0
        %277 = vmatpush1.xpose.msra.mxu0 0.0
        %278 = vmatprep.subr.mxu0 0.0
        %279 = vmatpush1.xpose.msra.mxu0 0.0
        %280 = vmatprep.subr.mxu0 0.0
        %281 = vmatpush1.xpose.msra.mxu0 0.0
        %282 = vmatprep.subr.mxu0 0.0
        %283 = vmatpush1.xpose.msra.mxu0 0.0
        %284 = vmatprep.subr.mxu0 0.0
        %285 = vmatpush1.xpose.msra.mxu0 0.0
        %286 = vmatprep.subr.mxu0 0.0
        %287 = vmatpush1.xpose.msra.mxu0 0.0
        %288 = vmatprep.subr.mxu0 0.0
        %289 = vmatpush1.xpose.msra.mxu0 0.0
        %290 = vmatprep.subr.mxu0 0.0
        %291 = vmatpush1.xpose.msra.mxu0 0.0
        %292 = vmatprep.subr.mxu0 0.0
        %293 = vmatpush1.xpose.msra.mxu0 0.0
        %294 = vmatprep.subr.mxu0 0.0
        %295 = vmatpush1.xpose.msra.mxu0 0.0
        %296 = vmatprep.subr.mxu0 0.0
        %297 = vmatpush1.xpose.msra.mxu0 0.0
        %298 = vmatprep.subr.mxu0 0.0
        %299 = vmatpush1.xpose.msra.mxu0 0.0
        %300 = vmatprep.subr.mxu0 0.0
        %301 = vmatpush1.xpose.msra.mxu0 0.0
        %302 = vmatprep.subr.mxu0 0.0
        %303 = vmatpush1.xpose.msra.mxu0 0.0
        %304 = vmatprep.subr.mxu0 0.0
        %305 = vmatpush1.xpose.msra.mxu0 0.0
        %306 = vmatprep.subr.mxu0 0.0
        %307 = vmatpush1.xpose.msra.mxu0 0.0
        %308 = vmatprep.subr.mxu0 0.0
        %309 = vmatpush1.xpose.msra.mxu0 0.0
        %310 = vmatprep.subr.mxu0 0.0
        %311 = vmatpush1.xpose.msra.mxu0 0.0
        %312 = vmatprep.subr.mxu0 0.0
        %313 = vmatpush1.xpose.msra.mxu0 0.0
        %314 = vmatprep.subr.mxu0 0.0
        %315 = vmatpush1.xpose.msra.mxu0 0.0
        %316 = vmatprep.subr.mxu0 0.0
        %317 = vmatpush1.xpose.msra.mxu0 0.0
        %318 = vmatprep.subr.mxu0 0.0
        %319 = vmatpush1.xpose.msra.mxu0 0.0
        %320 = vmatprep.mubr.f32.mxu0 0.0
        %321 = vmatmul.mubr.f32.gmra.mrb[0].mxu0 %v253
        %v322 = vpop.f32.mrb[0].mxu0
        %v323 = vadd.f32 0.0, %v322
        %v324 = vpop.f32.mrb[0].mxu0
        %325 = vdwg.mxu0
        %v326 = vlaneseq
        %v327 = vshrl.u32 %v326, 7
        %v328 = vlaneseq
        %v329 = vand.u32 %v328, 127
        %v330 = vstv %s251
        %v331 = vadd.s32 %v327, %v330
        %vm332 = vcmp.ne.s32.totalorder %v329, %v331
        %v333 = vsel %vm332, 1, 0
        %v334 = vcvt.s32.f32 %v333
        %v335 = vld [vmem:[%s217] sm:$0xff]
        %v336 = vld [vmem:[#allocation7] sm:$0x1]
        %337 = vset.pattern.permute.xlu0 0
        %338 = vperm.xlu0 %337, %v335
        %v339 = vpop.permute.xlu0 %338
        %v340 = vlaneseq
        %v341 = vshrl.u32 %v340, 7
        %v342 = vsub.s32 0, %v341
        %v343 = vrot.slane %v336, %v342
        %vm344 = vcmp.eq.s32.totalorder %v339, %v343
        %vm345 = vmand %vm344, %vm332
        %v346 = vsel %vm345, 1, 0
        %v347 = vcvt.s32.f32 %v346
        %v348 = vsub.f32 %v323, 14.285714
        %v349 = vmul.f32 %v348, 1.442695
        %v350 = vpow.pop %v349
        %v351 = vmax.f32 %v350, 1e-08
        %v352 = vmul.f32 %v351, %v334
        %vm353 = vcmask 130048
        %v354 = vsel %vm353, %v352, 0.0
        %355 = vadd.xlane.f32.xlu0 %v354
        %v356 = vpop.xlane.xlu0 %355
        %v357 = vadd.f32 %v356, 1e-08
        %v358 = vlog2.pop %v357
        %v359 = vmul.f32 %v358, 0.6931472
        %v360 = vsel %vm353, %v347, 0.0
        %361 = vadd.xlane.f32.xlu0 %v360
        %v362 = vpop.xlane.xlu0 %361
        %v363 = vmul.f32 %v347, %v348
        %v364 = vsel %vm353, %v363, 0.0
        %365 = vadd.xlane.f32.xlu0 %v364
        %v366 = vpop.xlane.xlu0 %365
        %v367 = vmul.f32 %v334, %v348
        %v368 = vsel %vm353, %v367, 0.0
        %369 = vadd.xlane.f32.xlu0 %v368
        %v370 = vpop.xlane.xlu0 %369
        %vm371 = vcmask 7168
        %v372 = vsel %vm371, %v362, 0.0
        %373 = vadd.xlane.f32.xlu0 %v372
        %v374 = vpop.xlane.xlu0 %373
        %v375 = vrot.slane %v374, 4
        %v376 = vadd.f32 %v374, %v375
        %v377 = vrot.slane %v376, 2
        %v378 = vadd.f32 %v376, %v377
        %v379 = vrot.slane %v378, 1
        %v380 = vadd.f32 %v378, %v379
        %s381 = vtos %v380
        %p382 = scmp.gt.f32.partialorder %s381, 0.0
        %s383 = scalar_select %p382, 1, 0
        %v384 = vstv %s383
        %vm385 = vcmp.eq.s32.totalorder %v384, 1
        %v386 = vsel %vm385, %v362, 15.0
        %v387 = vsel %vm385, %v366, %v370
        %vm388 = vcmp.gt.f32.partialorder %v386, 0.0
        %v389 = vsel %vm388, 1, 0
        %v390 = vcvt.s32.f32 %v389
        %v391 = vmul.f32 %v386, %v359
        %v392 = vsub.f32 %v391, %v387
        %v393 = vmul.f32 %v390, %v392
        %v394 = vmax.f32 %v386, 1.0
        %v395 = vrcp.pop %v394
        %v396 = vmul.f32 %v393, %v395
        %397 = vst.msk [vmem:[%s243] sm:$0xff] %vm371, %v396
        %398 = vst.msk [vmem:[%s250] sm:$0xff] %vm371, %v390
        %s399 = sand.u32 %s102, 1
        %s400 = scalar_lea.sflag [#allocation4], %s399
        %s401 = sand.u32 %s102, 1
        %s402 = smul.addr %s401, 8
        %s403 = scalar_lea.vmem [#allocation8], %s402
        %s404 = sand.u32 %s128, 1
        %s405 = scalar_lea.sflag [#allocation10], %s404
        %s406 = sand.u32 %s128, 1
        %s407 = smul.addr %s406, 8
        %s408 = scalar_lea.vmem [#allocation9], %s407
        // Predicated region
        $region45: #{tpu_custom_call.1} parent=31 // pred_check
          %p409 = pneg %p112
        $region46: #{tpu_custom_call.1} parent=31 // pred_check_branch
          %411 = sbr.rel (%p409) target = $region48
        $region47: #{tpu_custom_call.1} parent=31 // pred_region
          %s413 = ssub.s32 128, 128
          %414 = vsyncadd %s400, %s413
          %s415 = smul.addr %s26, 128
          %s416 = scalar_lea.hbm %s3, %s415
          %s418 = sshll.u32 %s403, 4
          %s419 = int_to_ptr.vmem [resolvable:$true] %s418
          %421 = dma.vmem_to_hbm [thread:$0]  %s419, 128, %s416, %s400
        $region48: #{tpu_custom_call.1} parent=31 // pred_fallthru
          _
        // Predicated region
        $region49: #{tpu_custom_call.1} parent=31 // pred_check
          %p422 = pneg %p138
        $region50: #{tpu_custom_call.1} parent=31 // pred_check_branch
          %424 = sbr.rel (%p422) target = $region52
        $region51: #{tpu_custom_call.1} parent=31 // pred_region
          %s426 = ssub.s32 128, 128
          %427 = vsyncadd %s405, %s426
          %s428 = smul.addr %s26, 128
          %s429 = scalar_lea.hbm %s4, %s428
          %s431 = sshll.u32 %s408, 4
          %s432 = int_to_ptr.vmem [resolvable:$true] %s431
          %434 = dma.vmem_to_hbm [thread:$0]  %s432, 128, %s429, %s405
        $region52: #{tpu_custom_call.1} parent=31 // pred_fallthru
          _
      $region32: #{tpu_custom_call.1} parent=5 // pred_fallthru
        _
      %p435 = scmp.le.s32.totalorder 2, %s21
      // Predicated region
      $region53: #{tpu_custom_call.1} parent=5 // pred_check
        %p436 = pneg %p435
      $region54: #{tpu_custom_call.1} parent=5 // pred_check_branch
        %438 = sbr.rel (%p436) target = $region56
      $region55: #{tpu_custom_call.1} parent=5 // pred_region
        %s439 = ssub.s32 %s21, 2
        // Predicated region
        $region57: #{tpu_custom_call.1} parent=55 // pred_check
          %p440 = pneg %p118
        $region58: #{tpu_custom_call.1} parent=55 // pred_check_branch
          %442 = sbr.rel (%p440) target = $region60
        $region59: #{tpu_custom_call.1} parent=55 // pred_region
          %s443 = sand.u32 %s103, 1
          %s444 = scalar_lea.sflag [#allocation4], %s443
          %s445 = sand.u32 %s103, 1
          %s446 = smul.addr %s445, 8
          %s447 = scalar_lea.vmem [#allocation8], %s446
          %448 = dma.done %s444, 128
        $region60: #{tpu_custom_call.1} parent=55 // pred_fallthru
          _
        // Predicated region
        $region61: #{tpu_custom_call.1} parent=55 // pred_check
          %p449 = pneg %p144
        $region62: #{tpu_custom_call.1} parent=55 // pred_check_branch
          %451 = sbr.rel (%p449) target = $region64
        $region63: #{tpu_custom_call.1} parent=55 // pred_region
          %s452 = sand.u32 %s129, 1
          %s453 = scalar_lea.sflag [#allocation10], %s452
          %s454 = sand.u32 %s129, 1
          %s455 = smul.addr %s454, 8
          %s456 = scalar_lea.vmem [#allocation9], %s455
          %457 = dma.done %s453, 128
        $region64: #{tpu_custom_call.1} parent=55 // pred_fallthru
          _
      $region56: #{tpu_custom_call.1} parent=5 // pred_fallthru
        _
    $region6: #{tpu_custom_call.1} parent=1 // loop_footer
      %s25 = sadd.s32 1, %s21
    $region7: #{tpu_custom_call.1} parent=1 // loop_footer_branch
      %20 = sbr.rel target = $region3
    $region8: #{tpu_custom_call.1} parent=1 // loop_exit
      _
    %458 = vsyncpa [#allocation3], 1
    %s459 = scalar_lea.sflag [#allocation3], 1
    %460 = vsyncpa %s459, 1
    %461 = vsyncpa [#allocation6], 1
    %s462 = scalar_lea.sflag [#allocation6], 1
    %463 = vsyncpa %s462, 1
    %464 = vsyncpa [#allocation4], 1
    %s465 = scalar_lea.sflag [#allocation4], 1
    %466 = vsyncpa %s465, 1
    %467 = vsyncpa [#allocation10], 1
    %s468 = scalar_lea.sflag [#allocation10], 1
    %469 = vsyncpa %s468, 1

// kernel: tpu_custom_call.1
$region0: #{tpu_custom_call.1}
  #allocation0 [shape = 'u32[]', space=smem, size = 0x4, offset = 0x4, fixed_abs, tag = 'smem constant byte address 0x4 - core index']
  #allocation1 [shape = 'u32[144,128]{1,0:T(1,128)}', space=vmem, size = 0x12000, scoped, tag = 'internal scratch']
  %s0 = inlined_call_operand.hbm [shape: f32[16,128], index: 0, kind: input, shape index: {}]
  %s1 = inlined_call_operand.hbm [shape: s32[16,1], index: 1, kind: input, shape index: {}]
  %s2 = inlined_call_operand.hbm [shape: s32[1,16], index: 2, kind: input, shape index: {}]
  %s3 = inlined_call_operand.hbm [shape: f32[16,1], index: 3, kind: output, shape index: {0}]
  %s4 = inlined_call_operand.hbm [shape: f32[16,1], index: 4, kind: output, shape index: {1}]
  %5 = xla_tuple %s3, %s4
  %s6 = sld [smem:[#allocation0]]
  $region65: #{tpu_custom_call.1} parent=0
    _
  %s8 = ssub.s32 1, %s6
  %s9 = scalar_select 0, %s8, %s6
  $region1: #{tpu_custom_call.1} parent=0
    #allocation2 [shape = 'u8[8192]{0}', space=vmem, size = 0x2000, scoped, tag = 'input window, operand 0, single buffered']
    #allocation3 [shape = 's32[2]{0}', space=sflag, size = 0x8, scoped, tag = 'scoped memory for tpu_custom_call.1']
    #allocation4 [shape = 's32[2]{0}', space=sflag, size = 0x8, scoped, tag = 'scoped memory for tpu_custom_call.1']
    #allocation5 [shape = 'u8[8192]{0}', space=vmem, size = 0x2000, scoped, tag = 'input window, operand 1']
    #allocation6 [shape = 's32[2]{0}', space=sflag, size = 0x8, scoped, tag = 'scoped memory for tpu_custom_call.1']
    #allocation7 [shape = 'u8[512]{0}', space=vmem, size = 0x400, scoped, tag = 'input window, operand 2, single buffered']
    #allocation8 [shape = 'u8[8192]{0}', space=vmem, size = 0x2000, scoped, tag = 'output window, operand 0']
    #allocation9 [shape = 'u8[8192]{0}', space=vmem, size = 0x2000, scoped, tag = 'output window, operand 1']
    #allocation10 [shape = 's32[2]{0}', space=sflag, size = 0x8, scoped, tag = 'scoped memory for tpu_custom_call.1']
    %10 = vsyncpa [#allocation3], 0
    %11 = vsyncpa [#allocation6], 0
    %s12 = scalar_lea.sflag [#allocation6], 1
    %13 = vsyncpa %s12, 0
    %14 = vsyncpa [#allocation4], 0
    %s15 = scalar_lea.sflag [#allocation4], 1
    %16 = vsyncpa %s15, 0
    %17 = vsyncpa [#allocation10], 0
    %s18 = scalar_lea.sflag [#allocation10], 1
    %19 = vsyncpa %s18, 0
    loop: start=0, step=1, limit=4
    $region2: #{tpu_custom_call.1} parent=1 // loop_pre_header
      _
    $region3: #{tpu_custom_call.1} parent=1 // loop_header
      %s21 = sphi 0, %s25
      %p22 = scmp.ge.s32.totalorder %s21, 4
      %s29 = sphi 0, %s29
      %s31 = sphi 0, %s29
      %s32 = sphi 0, %s31
      %s46 = sphi 0, %s32
      %s52 = sphi 0, %s54
      %s55 = sphi 0, %s52
      %s56 = sphi 0, %s55
      %s72 = sphi 0, %s56
      %s76 = sphi 0, %s76
      %s78 = sphi 0, %s76
      %s79 = sphi 0, %s78
      %s93 = sphi 0, %s79
      %s99 = sphi 0, %s101
      %s102 = sphi 0, %s99
      %s103 = sphi 0, %s102
      %s119 = sphi 0, %s103
      %s125 = sphi 0, %s127
      %s128 = sphi 0, %s125
      %s129 = sphi 0, %s128
      %s145 = sphi 0, %s129
    $region4: #{tpu_custom_call.1} parent=1 // loop_header_branch
      %24 = sbr.rel (%p22) target = $region8
    $region5: #{tpu_custom_call.1} parent=1 // loop_body
      %s26 = ssub.s32 %s21, 1
      %s27 = ssub.s32 %s21, 2
      %s28 = sadd.s32 %s21, 1
      %s30 = sadd.s32 %s29, 1
      %p33 = scmp.eq.s32.totalorder %s21, 1
      %p34 = scmp.ne.s32.totalorder %s29, %s31
      %p35 = scmp.eq.s32.totalorder %s21, 0
      %p36 = por %p34, %p35
      %p37 = scmp.ne.s32.totalorder %s29, %s31
      %p38 = scmp.eq.s32.totalorder %s26, 1
      %p39 = por %p37, %p38
      %p40 = scmp.ne.s32.totalorder %s31, %s32
      %p41 = scmp.eq.s32.totalorder %s26, 0
      %p42 = por %p40, %p41
      %p43 = scmp.ne.s32.totalorder %s31, %s32
      %p44 = scmp.eq.s32.totalorder %s27, 1
      %p45 = por %p43, %p44
      %p47 = scmp.ne.s32.totalorder %s32, %s46
      %p48 = scmp.eq.s32.totalorder %s27, 0
      %p49 = por %p47, %p48
      %s50 = ssub.s32 %s21, %s28
      %p51 = scmp.eq.s32.totalorder %s50, 0
      %s53 = sadd.s32 %s52, 1
      %s54 = scalar_select %p51, %s52, %s53
      %p57 = pneg %p51
      %p58 = scmp.eq.s32.totalorder %s21, 1
      %p59 = por %p57, %p58
      %p60 = scmp.ne.s32.totalorder %s52, %s55
      %p61 = scmp.eq.s32.totalorder %s21, 0
      %p62 = por %p60, %p61
      %p63 = scmp.ne.s32.totalorder %s52, %s55
      %p64 = scmp.eq.s32.totalorder %s26, 1
      %p65 = por %p63, %p64
      %p66 = scmp.ne.s32.totalorder %s55, %s56
      %p67 = scmp.eq.s32.totalorder %s26, 0
      %p68 = por %p66, %p67
      %p69 = scmp.ne.s32.totalorder %s55, %s56
      %p70 = scmp.eq.s32.totalorder %s27, 1
      %p71 = por %p69, %p70
      %p73 = scmp.ne.s32.totalorder %s56, %s72
      %p74 = scmp.eq.s32.totalorder %s27, 0
      %p75 = por %p73, %p74
      %s77 = sadd.s32 %s76, 1
      %p80 = scmp.eq.s32.totalorder %s21, 1
      %p81 = scmp.ne.s32.totalorder %s76, %s78
      %p82 = scmp.eq.s32.totalorder %s21, 0
      %p83 = por %p81, %p82
      %p84 = scmp.ne.s32.totalorder %s76, %s78
      %p85 = scmp.eq.s32.totalorder %s26, 1
      %p86 = por %p84, %p85
      %p87 = scmp.ne.s32.totalorder %s78, %s79
      %p88 = scmp.eq.s32.totalorder %s26, 0
      %p89 = por %p87, %p88
      %p90 = scmp.ne.s32.totalorder %s78, %s79
      %p91 = scmp.eq.s32.totalorder %s27, 1
      %p92 = por %p90, %p91
      %p94 = scmp.ne.s32.totalorder %s79, %s93
      %p95 = scmp.eq.s32.totalorder %s27, 0
      %p96 = por %p94, %p95
      %s97 = ssub.s32 %s21, %s28
      %p98 = scmp.eq.s32.totalorder %s97, 0
      %s100 = sadd.s32 %s99, 1
      %s101 = scalar_select %p98, %s99, %s100
      %p104 = pneg %p98
      %p105 = scmp.eq.s32.totalorder %s21, 1
      %p106 = por %p104, %p105
      %p107 = scmp.ne.s32.totalorder %s99, %s102
      %p108 = scmp.eq.s32.totalorder %s21, 0
      %p109 = por %p107, %p108
      %p110 = scmp.ne.s32.totalorder %s99, %s102
      %p111 = scmp.eq.s32.totalorder %s26, 1
      %p112 = por %p110, %p111
      %p113 = scmp.ne.s32.totalorder %s102, %s103
      %p114 = scmp.eq.s32.totalorder %s26, 0
      %p115 = por %p113, %p114
      %p116 = scmp.ne.s32.totalorder %s102, %s103
      %p117 = scmp.eq.s32.totalorder %s27, 1
      %p118 = por %p116, %p117
      %p120 = scmp.ne.s32.totalorder %s103, %s119
      %p121 = scmp.eq.s32.totalorder %s27, 0
      %p122 = por %p120, %p121
      %s123 = ssub.s32 %s21, %s28
      %p124 = scmp.eq.s32.totalorder %s123, 0
      %s126 = sadd.s32 %s125, 1
      %s127 = scalar_select %p124, %s125, %s126
      %p130 = pneg %p124
      %p131 = scmp.eq.s32.totalorder %s21, 1
      %p132 = por %p130, %p131
      %p133 = scmp.ne.s32.totalorder %s125, %s128
      %p134 = scmp.eq.s32.totalorder %s21, 0
      %p135 = por %p133, %p134
      %p136 = scmp.ne.s32.totalorder %s125, %s128
      %p137 = scmp.eq.s32.totalorder %s26, 1
      %p138 = por %p136, %p137
      %p139 = scmp.ne.s32.totalorder %s128, %s129
      %p140 = scmp.eq.s32.totalorder %s26, 0
      %p141 = por %p139, %p140
      %p142 = scmp.ne.s32.totalorder %s128, %s129
      %p143 = scmp.eq.s32.totalorder %s27, 1
      %p144 = por %p142, %p143
      %p146 = scmp.ne.s32.totalorder %s129, %s145
      %p147 = scmp.eq.s32.totalorder %s27, 0
      %p148 = por %p146, %p147
      %p149 = scmp.le.s32.totalorder 1, %s21
      %p150 = scmp.lt.s32.totalorder %s21, 3
      %p151 = pnand %p149, %p150
      %p152 = pneg %p151
      // Predicated region
      $region9: #{tpu_custom_call.1} parent=5 // pred_check
        _
      $region10: #{tpu_custom_call.1} parent=5 // pred_check_branch
        %154 = sbr.rel (%p151) target = $region12
      $region11: #{tpu_custom_call.1} parent=5 // pred_region
        %s155 = ssub.s32 %s21, 1
        // Predicated region
        $region13: #{tpu_custom_call.1} parent=11 // pred_check
          %p156 = pneg %p42
        $region14: #{tpu_custom_call.1} parent=11 // pred_check_branch
          %158 = sbr.rel (%p156) target = $region16
        $region15: #{tpu_custom_call.1} parent=11 // pred_region
          %s160 = ssub.s32 256, 256
          %161 = vsyncadd [#allocation3], %s160
          %s162 = sshll.u32 [#allocation2], 4
          %s163 = int_to_ptr.vmem [resolvable:$true] %s162
          %168 = dma.hbm_to_vmem [thread:$0]  %s0, 256, %s163, [#allocation3], 128, 128, 8
        $region16: #{tpu_custom_call.1} parent=11 // pred_fallthru
          _
        // Predicated region
        $region17: #{tpu_custom_call.1} parent=11 // pred_check
          %p169 = pneg %p89
        $region18: #{tpu_custom_call.1} parent=11 // pred_check_branch
          %171 = sbr.rel (%p169) target = $region20
        $region19: #{tpu_custom_call.1} parent=11 // pred_region
          %s173 = ssub.s32 16, 16
          %174 = vsyncadd [#allocation6], %s173
          %s176 = sshll.u32 [#allocation7], 4
          %s177 = int_to_ptr.vmem [resolvable:$true] %s176
          %179 = dma.hbm_to_vmem [thread:$0]  %s2, 16, %s177, [#allocation6]
        $region20: #{tpu_custom_call.1} parent=11 // pred_fallthru
          _
      $region12: #{tpu_custom_call.1} parent=5 // pred_fallthru
        _
      %p180 = scmp.lt.s32.totalorder %s21, 2
      // Predicated region
      $region21: #{tpu_custom_call.1} parent=5 // pred_check
        %p181 = pneg %p180
      $region22: #{tpu_custom_call.1} parent=5 // pred_check_branch
        %183 = sbr.rel (%p181) target = $region24
      $region23: #{tpu_custom_call.1} parent=5 // pred_region
        // Predicated region
        $region25: #{tpu_custom_call.1} parent=23 // pred_check
          %p184 = pneg %p62
        $region26: #{tpu_custom_call.1} parent=23 // pred_check_branch
          %186 = sbr.rel (%p184) target = $region28
        $region27: #{tpu_custom_call.1} parent=23 // pred_region
          %s187 = sand.u32 %s21, 1
          %s188 = scalar_lea.sflag [#allocation6], %s187
          %s189 = sand.u32 %s52, 1
          %s190 = smul.addr %s189, 8
          %s191 = scalar_lea.vmem [#allocation5], %s190
          %s193 = ssub.s32 128, 128
          %194 = vsyncadd %s188, %s193
          %s195 = smul.addr %s21, 128
          %s196 = scalar_lea.hbm %s1, %s195
          %s198 = sshll.u32 %s191, 4
          %s199 = int_to_ptr.vmem [resolvable:$true] %s198
          %201 = dma.hbm_to_vmem [thread:$0]  %s196, 128, %s199, %s188
        $region28: #{tpu_custom_call.1} parent=23 // pred_fallthru
          _
      $region24: #{tpu_custom_call.1} parent=5 // pred_fallthru
        _
      %p202 = scmp.le.s32.totalorder 1, %s21
      %p203 = scmp.lt.s32.totalorder %s21, 3
      %p204 = pnand %p202, %p203
      %p205 = pneg %p204
      // Predicated region
      $region29: #{tpu_custom_call.1} parent=5 // pred_check
        _
      $region30: #{tpu_custom_call.1} parent=5 // pred_check_branch
        %207 = sbr.rel (%p204) target = $region32
      $region31: #{tpu_custom_call.1} parent=5 // pred_region
        %s208 = ssub.s32 %s21, 1
        // Predicated region
        $region33: #{tpu_custom_call.1} parent=31 // pred_check
          %p209 = pneg %p42
        $region34: #{tpu_custom_call.1} parent=31 // pred_check_branch
          %211 = sbr.rel (%p209) target = $region36
        $region35: #{tpu_custom_call.1} parent=31 // pred_region
          %212 = dma.done [#allocation3], 256
        $region36: #{tpu_custom_call.1} parent=31 // pred_fallthru
          _
        %s213 = sand.u32 %s26, 1
        %s214 = scalar_lea.sflag [#allocation6], %s213
        %s215 = sand.u32 %s55, 1
        %s216 = smul.addr %s215, 8
        %s217 = scalar_lea.vmem [#allocation5], %s216
        // Predicated region
        $region37: #{tpu_custom_call.1} parent=31 // pred_check
          %p218 = pneg %p68
        $region38: #{tpu_custom_call.1} parent=31 // pred_check_branch
          %220 = sbr.rel (%p218) target = $region40
        $region39: #{tpu_custom_call.1} parent=31 // pred_region
          %221 = dma.done %s214, 128
        $region40: #{tpu_custom_call.1} parent=31 // pred_fallthru
          _
        // Predicated region
        $region41: #{tpu_custom_call.1} parent=31 // pred_check
          %p222 = pneg %p89
        $region42: #{tpu_custom_call.1} parent=31 // pred_check_branch
          %224 = sbr.rel (%p222) target = $region44
        $region43: #{tpu_custom_call.1} parent=31 // pred_region
          %225 = dma.done [#allocation6], 16
        $region44: #{tpu_custom_call.1} parent=31 // pred_fallthru
          _
        %p226 = pneg %p42
        %p227 = pneg %p39
        %s228 = sand.u32 %s26, 1
        %s229 = scalar_lea.sflag [#allocation6], %s228
        %s230 = sand.u32 %s55, 1
        %s231 = smul.addr %s230, 8
        %s232 = scalar_lea.vmem [#allocation5], %s231
        %p233 = pneg %p68
        %p234 = pneg %p65
        %p235 = pneg %p89
        %p236 = pneg %p86
        %p237 = pneg %p115
        %p238 = pneg %p112
        %s239 = sand.u32 %s102, 1
        %s240 = scalar_lea.sflag [#allocation4], %s239
        %s241 = sand.u32 %s102, 1
        %s242 = smul.addr %s241, 8
        %s243 = scalar_lea.vmem [#allocation8], %s242
        %p244 = pneg %p141
        %p245 = pneg %p138
        %s246 = sand.u32 %s128, 1
        %s247 = scalar_lea.sflag [#allocation10], %s246
        %s248 = sand.u32 %s128, 1
        %s249 = smul.addr %s248, 8
        %s250 = scalar_lea.vmem [#allocation9], %s249
        %s251 = smul.u32 %s26, 8
        %s252 = scalar_lea.vmem [#allocation2], %s251
        %v253 = vld [vmem:[%s252] sm:$0xff]
        %v254 = vld [vmem:[#allocation2] sm:$0xff]
        %v255 = vld [vmem:[#allocation2 + $0x8] sm:$0xff]
        %256 = vmatprep.subr.mxu0 0.0
        %257 = vmatpush1.xpose.msra.mxu0 %v254
        %258 = vmatprep.subr.mxu0 0.0
        %259 = vmatpush1.xpose.msra.mxu0 %v255
        %260 = vmatprep.subr.mxu0 0.0
        %261 = vmatpush1.xpose.msra.mxu0 0.0
        %262 = vmatprep.subr.mxu0 0.0
        %263 = vmatpush1.xpose.msra.mxu0 0.0
        %264 = vmatprep.subr.mxu0 0.0
        %265 = vmatpush1.xpose.msra.mxu0 0.0
        %266 = vmatprep.subr.mxu0 0.0
        %267 = vmatpush1.xpose.msra.mxu0 0.0
        %268 = vmatprep.subr.mxu0 0.0
        %269 = vmatpush1.xpose.msra.mxu0 0.0
        %270 = vmatprep.subr.mxu0 0.0
        %271 = vmatpush1.xpose.msra.mxu0 0.0
        %272 = vmatprep.subr.mxu0 0.0
        %273 = vmatpush1.xpose.msra.mxu0 0.0
        %274 = vmatprep.subr.mxu0 0.0
        %275 = vmatpush1.xpose.msra.mxu0 0.0
        %276 = vmatprep.subr.mxu0 0.0
        %277 = vmatpush1.xpose.msra.mxu0 0.0
        %278 = vmatprep.subr.mxu0 0.0
        %279 = vmatpush1.xpose.msra.mxu0 0.0
        %280 = vmatprep.subr.mxu0 0.0
        %281 = vmatpush1.xpose.msra.mxu0 0.0
        %282 = vmatprep.subr.mxu0 0.0
        %283 = vmatpush1.xpose.msra.mxu0 0.0
        %284 = vmatprep.subr.mxu0 0.0
        %285 = vmatpush1.xpose.msra.mxu0 0.0
        %286 = vmatprep.subr.mxu0 0.0
        %287 = vmatpush1.xpose.msra.mxu0 0.0
        %288 = vmatprep.subr.mxu0 0.0
        %289 = vmatpush1.xpose.msra.mxu0 0.0
        %290 = vmatprep.subr.mxu0 0.0
        %291 = vmatpush1.xpose.msra.mxu0 0.0
        %292 = vmatprep.subr.mxu0 0.0
        %293 = vmatpush1.xpose.msra.mxu0 0.0
        %294 = vmatprep.subr.mxu0 0.0
        %295 = vmatpush1.xpose.msra.mxu0 0.0
        %296 = vmatprep.subr.mxu0 0.0
        %297 = vmatpush1.xpose.msra.mxu0 0.0
        %298 = vmatprep.subr.mxu0 0.0
        %299 = vmatpush1.xpose.msra.mxu0 0.0
        %300 = vmatprep.subr.mxu0 0.0
        %301 = vmatpush1.xpose.msra.mxu0 0.0
        %302 = vmatprep.subr.mxu0 0.0
        %303 = vmatpush1.xpose.msra.mxu0 0.0
        %304 = vmatprep.subr.mxu0 0.0
        %305 = vmatpush1.xpose.msra.mxu0 0.0
        %306 = vmatprep.subr.mxu0 0.0
        %307 = vmatpush1.xpose.msra.mxu0 0.0
        %308 = vmatprep.subr.mxu0 0.0
        %309 = vmatpush1.xpose.msra.mxu0 0.0
        %310 = vmatprep.subr.mxu0 0.0
        %311 = vmatpush1.xpose.msra.mxu0 0.0
        %312 = vmatprep.subr.mxu0 0.0
        %313 = vmatpush1.xpose.msra.mxu0 0.0
        %314 = vmatprep.subr.mxu0 0.0
        %315 = vmatpush1.xpose.msra.mxu0 0.0
        %316 = vmatprep.subr.mxu0 0.0
        %317 = vmatpush1.xpose.msra.mxu0 0.0
        %318 = vmatprep.subr.mxu0 0.0
        %319 = vmatpush1.xpose.msra.mxu0 0.0
        %320 = vmatprep.mubr.f32.mxu0 0.0
        %321 = vmatmul.mubr.f32.gmra.mrb[0].mxu0 %v253
        %v322 = vpop.f32.mrb[0].mxu0
        %v323 = vadd.f32 0.0, %v322
        %v324 = vpop.f32.mrb[0].mxu0
        %325 = vdwg.mxu0
        %v326 = vlaneseq
        %v327 = vshrl.u32 %v326, 7
        %v328 = vlaneseq
        %v329 = vand.u32 %v328, 127
        %v330 = vstv %s251
        %v331 = vadd.s32 %v327, %v330
        %vm332 = vcmp.ne.s32.totalorder %v329, %v331
        %v333 = vsel %vm332, 1, 0
        %v334 = vcvt.s32.f32 %v333
        %v335 = vld [vmem:[%s217] sm:$0xff]
        %v336 = vld [vmem:[#allocation7] sm:$0x1]
        %337 = vset.pattern.permute.xlu0 0
        %338 = vperm.xlu0 %337, %v335
        %v339 = vpop.permute.xlu0 %338
        %v340 = vlaneseq
        %v341 = vshrl.u32 %v340, 7
        %v342 = vsub.s32 0, %v341
        %v343 = vrot.slane %v336, %v342
        %vm344 = vcmp.eq.s32.totalorder %v339, %v343
        %vm345 = vmand %vm344, %vm332
        %v346 = vsel %vm345, 1, 0
        %v347 = vcvt.s32.f32 %v346
        %v348 = vsub.f32 %v323, 14.285714
        %v349 = vmul.f32 %v348, 1.442695
        %v350 = vpow.pop %v349
        %v351 = vmax.f32 %v350, 1e-08
        %v352 = vmul.f32 %v351, %v334
        %vm353 = vcmask 130048
        %v354 = vsel %vm353, %v352, 0.0
        %355 = vadd.xlane.f32.xlu0 %v354
        %v356 = vpop.xlane.xlu0 %355
        %v357 = vadd.f32 %v356, 1e-08
        %v358 = vlog2.pop %v357
        %v359 = vmul.f32 %v358, 0.6931472
        %v360 = vsel %vm353, %v347, 0.0
        %361 = vadd.xlane.f32.xlu0 %v360
        %v362 = vpop.xlane.xlu0 %361
        %v363 = vmul.f32 %v347, %v348
        %v364 = vsel %vm353, %v363, 0.0
        %365 = vadd.xlane.f32.xlu0 %v364
        %v366 = vpop.xlane.xlu0 %365
        %v367 = vmul.f32 %v334, %v348
        %v368 = vsel %vm353, %v367, 0.0
        %369 = vadd.xlane.f32.xlu0 %v368
        %v370 = vpop.xlane.xlu0 %369
        %vm371 = vcmask 7168
        %v372 = vsel %vm371, %v362, 0.0
        %373 = vadd.xlane.f32.xlu0 %v372
        %v374 = vpop.xlane.xlu0 %373
        %v375 = vrot.slane %v374, 4
        %v376 = vadd.f32 %v374, %v375
        %v377 = vrot.slane %v376, 2
        %v378 = vadd.f32 %v376, %v377
        %v379 = vrot.slane %v378, 1
        %v380 = vadd.f32 %v378, %v379
        %s381 = vtos %v380
        %p382 = scmp.gt.f32.partialorder %s381, 0.0
        %s383 = scalar_select %p382, 1, 0
        %v384 = vstv %s383
        %vm385 = vcmp.eq.s32.totalorder %v384, 1
        %v386 = vsel %vm385, %v362, 15.0
        %v387 = vsel %vm385, %v366, %v370
        %vm388 = vcmp.gt.f32.partialorder %v386, 0.0
        %v389 = vsel %vm388, 1, 0
        %v390 = vcvt.s32.f32 %v389
        %v391 = vmul.f32 %v386, %v359
        %v392 = vsub.f32 %v391, %v387
        %v393 = vmul.f32 %v390, %v392
        %v394 = vmax.f32 %v386, 1.0
        %v395 = vrcp.pop %v394
        %v396 = vmul.f32 %v393, %v395
        %397 = vst.msk [vmem:[%s243] sm:$0xff] %vm371, %v396
        %398 = vst.msk [vmem:[%s250] sm:$0xff] %vm371, %v390
        %s399 = sand.u32 %s102, 1
        %s400 = scalar_lea.sflag [#allocation4], %s399
        %s401 = sand.u32 %s102, 1
        %s402 = smul.addr %s401, 8
        %s403 = scalar_lea.vmem [#allocation8], %s402
        %s404 = sand.u32 %s128, 1
        %s405 = scalar_lea.sflag [#allocation10], %s404
        %s406 = sand.u32 %s128, 1
        %s407 = smul.addr %s406, 8
        %s408 = scalar_lea.vmem [#allocation9], %s407
        // Predicated region
        $region45: #{tpu_custom_call.1} parent=31 // pred_check
          %p409 = pneg %p112
        $region46: #{tpu_custom_call.1} parent=31 // pred_check_branch
          %411 = sbr.rel (%p409) target = $region48
        $region47: #{tpu_custom_call.1} parent=31 // pred_region
          %s413 = ssub.s32 128, 128
          %414 = vsyncadd %s400, %s413
          %s415 = smul.addr %s26, 128
          %s416 = scalar_lea.hbm %s3, %s415
          %s418 = sshll.u32 %s403, 4
          %s419 = int_to_ptr.vmem [resolvable:$true] %s418
          %421 = dma.vmem_to_hbm [thread:$0]  %s419, 128, %s416, %s400
        $region48: #{tpu_custom_call.1} parent=31 // pred_fallthru
          _
        // Predicated region
        $region49: #{tpu_custom_call.1} parent=31 // pred_check
          %p422 = pneg %p138
        $region50: #{tpu_custom_call.1} parent=31 // pred_check_branch
          %424 = sbr.rel (%p422) target = $region52
        $region51: #{tpu_custom_call.1} parent=31 // pred_region
          %s426 = ssub.s32 128, 128
          %427 = vsyncadd %s405, %s426
          %s428 = smul.addr %s26, 128
          %s429 = scalar_lea.hbm %s4, %s428
          %s431 = sshll.u32 %s408, 4
          %s432 = int_to_ptr.vmem [resolvable:$true] %s431
          %434 = dma.vmem_to_hbm [thread:$0]  %s432, 128, %s429, %s405
        $region52: #{tpu_custom_call.1} parent=31 // pred_fallthru
          _
      $region32: #{tpu_custom_call.1} parent=5 // pred_fallthru
        _
      %p435 = scmp.le.s32.totalorder 2, %s21
      // Predicated region
      $region53: #{tpu_custom_call.1} parent=5 // pred_check
        %p436 = pneg %p435
      $region54: #{tpu_custom_call.1} parent=5 // pred_check_branch
        %438 = sbr.rel (%p436) target = $region56
      $region55: #{tpu_custom_call.1} parent=5 // pred_region
        %s439 = ssub.s32 %s21, 2
        // Predicated region
        $region57: #{tpu_custom_call.1} parent=55 // pred_check
          %p440 = pneg %p118
        $region58: #{tpu_custom_call.1} parent=55 // pred_check_branch
          %442 = sbr.rel (%p440) target = $region60
        $region59: #{tpu_custom_call.1} parent=55 // pred_region
          %s443 = sand.u32 %s103, 1
          %s444 = scalar_lea.sflag [#allocation4], %s443
          %s445 = sand.u32 %s103, 1
          %s446 = smul.addr %s445, 8
          %s447 = scalar_lea.vmem [#allocation8], %s446
          %448 = dma.done %s444, 128
        $region60: #{tpu_custom_call.1} parent=55 // pred_fallthru
          _
        // Predicated region
        $region61: #{tpu_custom_call.1} parent=55 // pred_check
          %p449 = pneg %p144
        $region62: #{tpu_custom_call.1} parent=55 // pred_check_branch
          %451 = sbr.rel (%p449) target = $region64
        $region63: #{tpu_custom_call.1} parent=55 // pred_region
          %s452 = sand.u32 %s129, 1
          %s453 = scalar_lea.sflag [#allocation10], %s452
          %s454 = sand.u32 %s129, 1
          %s455 = smul.addr %s454, 8
          %s456 = scalar_lea.vmem [#allocation9], %s455
          %457 = dma.done %s453, 128
        $region64: #{tpu_custom_call.1} parent=55 // pred_fallthru
          _
      $region56: #{tpu_custom_call.1} parent=5 // pred_fallthru
        _
    $region6: #{tpu_custom_call.1} parent=1 // loop_footer
      %s25 = sadd.s32 1, %s21
    $region7: #{tpu_custom_call.1} parent=1 // loop_footer_branch
      %20 = sbr.rel target = $region3
    $region8: #{tpu_custom_call.1} parent=1 // loop_exit
      _
    %458 = vsyncpa [#allocation3], 1
    %s459 = scalar_lea.sflag [#allocation3], 1
    %460 = vsyncpa %s459, 1
    %461 = vsyncpa [#allocation6], 1
    %s462 = scalar_lea.sflag [#allocation6], 1
    %463 = vsyncpa %s462, 1
    %464 = vsyncpa [#allocation4], 1
    %s465 = scalar_lea.sflag [#allocation4], 1
    %466 = vsyncpa %s465, 1
    %467 = vsyncpa [#allocation10], 1
    %s468 = scalar_lea.sflag [#allocation10], 1
    %469 = vsyncpa %s468, 1

</llo_original>
